<compile_context>
chip_gen: v7x
topology: tpu7x:2x2x1
jax: 0.10.0
libtpu: 0.0.40
codegen_flags: <defaults>
</compile_context>

<pallas_src>
import jax
import jax.numpy as jnp
from jax.experimental import pallas as pl
from jax.experimental.pallas import tpu as pltpu


def mlp_kernel(x_ref, w1_ref, w2_ref, w3_ref, o_ref):
    # x: [bm, 784], w1: [784, W], w2: [W, W], w3: [W, 128-padded], o: [bm, 128-padded]
    h1 = jnp.dot(x_ref[...], w1_ref[...], preferred_element_type=jnp.float32)
    h1 = jnp.maximum(h1, 0.0).astype(w2_ref.dtype)       # ReLU on f32 accumulator
    h2 = jnp.dot(h1, w2_ref[...], preferred_element_type=jnp.float32)
    h2 = jnp.maximum(h2, 0.0).astype(w3_ref.dtype)
    out = jnp.dot(h2, w3_ref[...], preferred_element_type=jnp.float32)
    o_ref[...] = out.astype(o_ref.dtype)


def _round_up(v, m):
    return -(-v // m) * m


def _tensorcores_per_chip():
    # Only v7x has 2 TensorCores per chip; everything else treated as 1.
    try:
        kind = jax.devices()[0].device_kind.lower()
    except Exception:
        return 1
    return 2 if "v7" in kind else 1


def _choose_bm(B, itemsize, n_cores):
    # Double-buffered x tile at the cap is ~6.4 MiB -- ample VMEM headroom.
    cap = 2048 if itemsize <= 2 else 1024
    if n_cores <= 1 or B <= 16:
        # Single TC (v5e/v6e) or tiny batch: one full-extent block if it fits,
        # otherwise tile at the cap and let the last block overhang (masked).
        return B if B <= cap else cap
    # v7x (2 TCs): even number of grid steps so both cores get balanced work.
    steps = 2 * max(1, pl.cdiv(B, 2 * cap))
    return _round_up(pl.cdiv(B, steps), 8)


def prepare_params(w1, w2, w3):
    """One-time weight preprocessing (hoisted out of the per-call graph).

    Pads the small head (e.g. 10 columns) to a 128-lane-dense layout so the
    kernel's output stores are unmasked full-lane `vst`.  Zero columns are
    exact because every layer is bias-free.
    """
    out_dim = w3.shape[1]
    out_p = _round_up(max(out_dim, 1), 128)
    if out_p != out_dim:
        w3 = jnp.pad(w3, ((0, 0), (0, out_p - out_dim)))
    return w1, w2, w3, out_dim


def mlp_forward(x, w1, w2, w3_padded, out_dim, *, bm=None):
    """Fused MLP forward.  (w1, w2, w3_padded, out_dim) come from prepare_params.

    Matches torch `.squeeze()`: returns [B, 10] for B > 1, [10] for B == 1.
    """
    B = x.shape[0]
    x2d = x.reshape(B, -1)                 # view(B, -1)[:, :, None, None] squeezed
    in_dim = x2d.shape[1]
    width = w1.shape[1]
    out_p = w3_padded.shape[1]
    assert w1.shape[0] == in_dim
    assert w2.shape == (width, width) and w3_padded.shape[0] == width

    if bm is None:
        bm = _choose_bm(B, jnp.dtype(x2d.dtype).itemsize, _tensorcores_per_chip())
    bm = min(bm, B)
    if bm != B:
        bm = _round_up(bm, 8)              # partial blocks need 8-row sublane alignment

    grid = (pl.cdiv(B, bm),)
    out = pl.pallas_call(
        mlp_kernel,
        out_shape=jax.ShapeDtypeStruct((B, out_p), x2d.dtype),
        grid_spec=pl.GridSpec(
            grid=grid,
            in_specs=[
                pl.BlockSpec((bm, in_dim), lambda i: (i, 0)),      # x: batch-tiled, K unpadded
                pl.BlockSpec((in_dim, width), lambda i: (0, 0)),   # weights: grid-invariant
                pl.BlockSpec((width, width), lambda i: (0, 0)),
                pl.BlockSpec((width, out_p), lambda i: (0, 0)),
            ],
            out_specs=pl.BlockSpec((bm, out_p), lambda i: (i, 0)),
        ),
        compiler_params=pltpu.CompilerParams(
            dimension_semantics=("parallel",),
            vmem_limit_bytes=32 * 1024 * 1024,
        ),
    )(x2d, w1, w2, w3_padded)

    result = out[:, :out_dim]
    # torch .squeeze(): would also drop an out_dim==1 axis, same as jnp.squeeze.
    return jnp.squeeze(result)


def init_params(key, in_dim=784, width=32, out_dim=10):
    # Deterministic kaiming-uniform-ish init; conv1x1 weights [out, in, 1, 1]
    # are generated then transposed to [in, out] for the kernel.
    k1, k2, k3 = jax.random.split(key, 3)

    def conv1x1_weight(k, out_c, in_c):
        bound = (6.0 / in_c) ** 0.5
        w = jax.random.uniform(k, (out_c, in_c), jnp.float32, -bound, bound)
        return w.T  # [in_c, out_c]

    w1 = conv1x1_weight(k1, width, in_dim)
    w2 = conv1x1_weight(k2, width, width)
    w3 = conv1x1_weight(k3, out_dim, width)
    return w1, w2, w3


if __name__ == "__main__":
    key = jax.random.PRNGKey(0)
    kx, kp = jax.random.split(key)

    B, width = 8, 32
    # MNIST-like input; forward flattens to [B, 784].
    x = jax.random.normal(kx, (B, 1, 28, 28), jnp.float32)
    w1, w2, w3 = init_params(kp, in_dim=784, width=width, out_dim=10)

    # Weight preprocessing done once, outside the per-call graph.
    pw1, pw2, pw3, out_dim = prepare_params(w1, w2, w3)

    # f32 path (tight correctness check against a plain-JAX reference).
    y = mlp_forward(x, pw1, pw2, pw3, out_dim)
    jax.block_until_ready(y)

    x2d = x.reshape(B, -1)
    ref = jnp.maximum(x2d @ w1, 0.0)
    ref = jnp.maximum(ref @ w2, 0.0)
    ref = ref @ w3
    assert y.shape == (B, 10)
    assert jnp.allclose(y, ref, atol=1e-4, rtol=1e-4)

    # Batch not a multiple of 8: a single full-extent block, still zero padding/copies.
    y5 = mlp_forward(x[:5], pw1, pw2, pw3, out_dim)
    jax.block_until_ready(y5)
    assert y5.shape == (5, 10)
    assert jnp.allclose(y5, ref[:5], atol=1e-4, rtol=1e-4)

    # bf16 fast path: halves HBM traffic for the bandwidth-bound x read;
    # MXU still accumulates in f32 and ReLU stays on the f32 accumulator.
    pb = prepare_params(
        w1.astype(jnp.bfloat16), w2.astype(jnp.bfloat16), w3.astype(jnp.bfloat16)
    )
    y_bf16 = mlp_forward(x.astype(jnp.bfloat16), *pb)
    jax.block_until_ready(y_bf16)
    assert y_bf16.shape == (B, 10)
    assert jnp.allclose(y_bf16.astype(jnp.float32), ref, atol=0.25, rtol=0.25)

    print("KERNEL_OK")
</pallas_src>

<mosaic_0001>
module attributes {stable_mosaic.version = 11 : i64} {
  func.func @mlp_kernel(%arg0: i32, %arg1: memref<8x784xf32, #tpu.memory_space<vmem>>, %arg2: memref<784x32xf32, #tpu.memory_space<vmem>>, %arg3: memref<32x32xf32, #tpu.memory_space<vmem>>, %arg4: memref<32x128xf32, #tpu.memory_space<vmem>>, %arg5: memref<8x128xf32, #tpu.memory_space<vmem>>) attributes {dimension_semantics = [#tpu.dimension_semantics<parallel>], iteration_bounds = array<i64: 1>, scalar_prefetch = 0 : i64, scratch_operands = 0 : i64, tpu.core_type = #tpu.core_type<tc>, window_params = [{transform_indices = @transform_0, window_bounds = array<i64: 8, 784>}, {pipeline_mode = #tpu.pipeline_mode<synchronous>, transform_indices = @transform_1, window_bounds = array<i64: 784, 32>}, {pipeline_mode = #tpu.pipeline_mode<synchronous>, transform_indices = @transform_2, window_bounds = array<i64: 32, 32>}, {pipeline_mode = #tpu.pipeline_mode<synchronous>, transform_indices = @transform_3, window_bounds = array<i64: 32, 128>}, {transform_indices = @transform_4, window_bounds = array<i64: 8, 128>}]} {
    %c0 = arith.constant 0 : index
    %c0_0 = arith.constant 0 : index
    %0 = vector.load %arg1[%c0, %c0_0] : memref<8x784xf32, #tpu.memory_space<vmem>>, vector<8x784xf32>
    %c0_1 = arith.constant 0 : index
    %c0_2 = arith.constant 0 : index
    %1 = vector.load %arg2[%c0_1, %c0_2] : memref<784x32xf32, #tpu.memory_space<vmem>>, vector<784x32xf32>
    %cst = arith.constant dense<0.000000e+00> : vector<8x32xf32>
    %2 = tpu.matmul %0, %1, %cst {dimension_numbers = #tpu.dot_dimension_numbers<[1], [0], [0], [1], [0, 0, 1, 1], [], []>} : vector<8x784xf32>, vector<784x32xf32>, vector<8x32xf32> -> vector<8x32xf32>
    %cst_3 = arith.constant 0.000000e+00 : f32
    %3 = vector.broadcast %cst_3 : f32 to vector<8x32xf32>
    %4 = arith.maximumf %2, %3 : vector<8x32xf32>
    %c0_4 = arith.constant 0 : index
    %c0_5 = arith.constant 0 : index
    %5 = vector.load %arg3[%c0_4, %c0_5] : memref<32x32xf32, #tpu.memory_space<vmem>>, vector<32x32xf32>
    %cst_6 = arith.constant dense<0.000000e+00> : vector<8x32xf32>
    %6 = tpu.matmul %4, %5, %cst_6 {dimension_numbers = #tpu.dot_dimension_numbers<[1], [0], [0], [1], [0, 0, 1, 1], [], []>} : vector<8x32xf32>, vector<32x32xf32>, vector<8x32xf32> -> vector<8x32xf32>
    %cst_7 = arith.constant 0.000000e+00 : f32
    %7 = vector.broadcast %cst_7 : f32 to vector<8x32xf32>
    %8 = arith.maximumf %6, %7 : vector<8x32xf32>
    %c0_8 = arith.constant 0 : index
    %c0_9 = arith.constant 0 : index
    %9 = vector.load %arg4[%c0_8, %c0_9] : memref<32x128xf32, #tpu.memory_space<vmem>>, vector<32x128xf32>
    %cst_10 = arith.constant dense<0.000000e+00> : vector<8x128xf32>
    %10 = tpu.matmul %8, %9, %cst_10 {dimension_numbers = #tpu.dot_dimension_numbers<[1], [0], [0], [1], [0, 0, 1, 1], [], []>} : vector<8x32xf32>, vector<32x128xf32>, vector<8x128xf32> -> vector<8x128xf32>
    %c0_11 = arith.constant 0 : index
    %c0_12 = arith.constant 0 : index
    %11 = vector.load %arg5[%c0_11, %c0_12] : memref<8x128xf32, #tpu.memory_space<vmem>>, vector<8x128xf32>
    tpu.vector_store %arg5[%c0_11, %c0_12], %10 {strides = array<i32>} : memref<8x128xf32, #tpu.memory_space<vmem>>, vector<8x128xf32>,
    return
  }
  func.func @transform_0(%arg0: i32) -> (i32, i32) {
    %c0_i32 = arith.constant 0 : i32
    %c0_i32_0 = arith.constant 0 : i32
    return %arg0, %c0_i32 : i32, i32
  }
  func.func @transform_1(%arg0: i32) -> (i32, i32) {
    %c0_i32 = arith.constant 0 : i32
    %c0_i32_0 = arith.constant 0 : i32
    %c0_i32_1 = arith.constant 0 : i32
    return %c0_i32, %c0_i32_0 : i32, i32
  }
  func.func @transform_2(%arg0: i32) -> (i32, i32) {
    %c0_i32 = arith.constant 0 : i32
    %c0_i32_0 = arith.constant 0 : i32
    %c0_i32_1 = arith.constant 0 : i32
    return %c0_i32, %c0_i32_0 : i32, i32
  }
  func.func @transform_3(%arg0: i32) -> (i32, i32) {
    %c0_i32 = arith.constant 0 : i32
    %c0_i32_0 = arith.constant 0 : i32
    %c0_i32_1 = arith.constant 0 : i32
    return %c0_i32, %c0_i32_0 : i32, i32
  }
  func.func @transform_4(%arg0: i32) -> (i32, i32) {
    %c0_i32 = arith.constant 0 : i32
    %c0_i32_0 = arith.constant 0 : i32
    return %arg0, %c0_i32 : i32, i32
  }
}

</mosaic_0001>

<llo_original>
// kernel: tpu_custom_call.1
$region0: #{tpu_custom_call.1}
  #allocation0 [shape = 'u32[]', space=smem, size = 0x4, offset = 0x4, fixed_abs, tag = 'smem constant byte address 0x4 - core index']
  #allocation1 [shape = 'u32[144,128]{1,0:T(1,128)}', space=vmem, size = 0x12000, scoped, tag = 'internal scratch']
  %s0 = inlined_call_operand.vmem [shape: f32[8,784], index: 0, kind: input, shape index: {}]
  %s1 = inlined_call_operand.vmem [shape: f32[784,32], index: 1, kind: input, shape index: {}]
  %s2 = inlined_call_operand.vmem [shape: f32[32,32], index: 2, kind: input, shape index: {}]
  %s3 = inlined_call_operand.vmem [shape: f32[32,128], index: 3, kind: input, shape index: {}]
  %s4 = inlined_call_operand.hbm [shape: f32[8,128], index: 4, kind: output, shape index: {}]
  %s5 = sld [smem:[#allocation0]]
  $region26: #{tpu_custom_call.1} parent=0
    _
  %s7 = ssub.s32 1, %s5
  %s8 = scalar_select 0, %s7, %s5
  $region1: #{tpu_custom_call.1} parent=0
    #allocation2 [shape = 'u8[4096]{0}', space=vmem, size = 0x1000, scoped, tag = 'output window, operand 0, single buffered']
    #allocation3 [shape = 's32[1]{0}', space=sflag, size = 0x4, scoped, tag = 'scoped memory for tpu_custom_call.1']
    %9 = vsyncpa [#allocation3], 0
    // Predicated region
    $region2: #{tpu_custom_call.1} parent=1 // pred_check
      _
    $region3: #{tpu_custom_call.1} parent=1 // pred_check_branch
      %11 = sbr.rel (0) target = $region5
    $region4: #{tpu_custom_call.1} parent=1 // pred_region
      _
    $region5: #{tpu_custom_call.1} parent=1 // pred_fallthru
      _
    // Predicated region
    $region6: #{tpu_custom_call.1} parent=1 // pred_check
      _
    $region7: #{tpu_custom_call.1} parent=1 // pred_check_branch
      %13 = sbr.rel (0) target = $region9
    $region8: #{tpu_custom_call.1} parent=1 // pred_region
      _
    $region9: #{tpu_custom_call.1} parent=1 // pred_fallthru
      _
    // Predicated region
    $region10: #{tpu_custom_call.1} parent=1 // pred_check
      _
    $region11: #{tpu_custom_call.1} parent=1 // pred_check_branch
      %15 = sbr.rel (0) target = $region13
    $region12: #{tpu_custom_call.1} parent=1 // pred_region
      _
    $region13: #{tpu_custom_call.1} parent=1 // pred_fallthru
      _
    // Predicated region
    $region14: #{tpu_custom_call.1} parent=1 // pred_check
      _
    $region15: #{tpu_custom_call.1} parent=1 // pred_check_branch
      %17 = sbr.rel (0) target = $region17
    $region16: #{tpu_custom_call.1} parent=1 // pred_region
      _
    $region17: #{tpu_custom_call.1} parent=1 // pred_fallthru
      _
    %v18 = vld [vmem:[%s0] sm:$0xff]
    %v19 = vld [vmem:[%s0 + $0x8] sm:$0xff]
    %v20 = vld [vmem:[%s0 + $0x10] sm:$0xff]
    %v21 = vld [vmem:[%s0 + $0x18] sm:$0xff]
    %v22 = vld [vmem:[%s0 + $0x20] sm:$0xff]
    %v23 = vld [vmem:[%s0 + $0x28] sm:$0xff]
    %v24 = vld [vmem:[%s0 + $0x30] sm:$0xff]
    %v25 = vld [vmem:[%s1] sm:$0xff]
    %v26 = vld [vmem:[%s1 + $0x8] sm:$0xff]
    %v27 = vld [vmem:[%s1 + $0x10] sm:$0xff]
    %v28 = vld [vmem:[%s1 + $0x18] sm:$0xff]
    %v29 = vld [vmem:[%s1 + $0x20] sm:$0xff]
    %v30 = vld [vmem:[%s1 + $0x28] sm:$0xff]
    %v31 = vld [vmem:[%s1 + $0x30] sm:$0xff]
    %v32 = vld [vmem:[%s1 + $0x38] sm:$0xff]
    %v33 = vld [vmem:[%s1 + $0x40] sm:$0xff]
    %v34 = vld [vmem:[%s1 + $0x48] sm:$0xff]
    %v35 = vld [vmem:[%s1 + $0x50] sm:$0xff]
    %v36 = vld [vmem:[%s1 + $0x58] sm:$0xff]
    %v37 = vld [vmem:[%s1 + $0x60] sm:$0xff]
    %v38 = vld [vmem:[%s1 + $0x68] sm:$0xff]
    %v39 = vld [vmem:[%s1 + $0x70] sm:$0xff]
    %v40 = vld [vmem:[%s1 + $0x78] sm:$0xff]
    %v41 = vld [vmem:[%s1 + $0x80] sm:$0xff]
    %v42 = vld [vmem:[%s1 + $0x88] sm:$0xff]
    %v43 = vld [vmem:[%s1 + $0x90] sm:$0xff]
    %v44 = vld [vmem:[%s1 + $0x98] sm:$0xff]
    %v45 = vld [vmem:[%s1 + $0xa0] sm:$0xff]
    %v46 = vld [vmem:[%s1 + $0xa8] sm:$0xff]
    %v47 = vld [vmem:[%s1 + $0xb0] sm:$0xff]
    %v48 = vld [vmem:[%s1 + $0xb8] sm:$0xff]
    %v49 = vld [vmem:[%s1 + $0xc0] sm:$0xff]
    %v50 = vld [vmem:[%s1 + $0xc8] sm:$0xff]
    %v51 = vld [vmem:[%s1 + $0xd0] sm:$0xff]
    %v52 = vld [vmem:[%s1 + $0xd8] sm:$0xff]
    %v53 = vld [vmem:[%s1 + $0xe0] sm:$0xff]
    %v54 = vld [vmem:[%s1 + $0xe8] sm:$0xff]
    %v55 = vld [vmem:[%s1 + $0xf0] sm:$0xff]
    %v56 = vld [vmem:[%s1 + $0xf8] sm:$0xff]
    %v57 = vld [vmem:[%s1 + $0x100] sm:$0xff]
    %v58 = vld [vmem:[%s1 + $0x108] sm:$0xff]
    %v59 = vld [vmem:[%s1 + $0x110] sm:$0xff]
    %v60 = vld [vmem:[%s1 + $0x118] sm:$0xff]
    %v61 = vld [vmem:[%s1 + $0x120] sm:$0xff]
    %v62 = vld [vmem:[%s1 + $0x128] sm:$0xff]
    %v63 = vld [vmem:[%s1 + $0x130] sm:$0xff]
    %v64 = vld [vmem:[%s1 + $0x138] sm:$0xff]
    %v65 = vld [vmem:[%s1 + $0x140] sm:$0xff]
    %v66 = vld [vmem:[%s1 + $0x148] sm:$0xff]
    %v67 = vld [vmem:[%s1 + $0x150] sm:$0xff]
    %v68 = vld [vmem:[%s1 + $0x158] sm:$0xff]
    %v69 = vld [vmem:[%s1 + $0x160] sm:$0xff]
    %v70 = vld [vmem:[%s1 + $0x168] sm:$0xff]
    %v71 = vld [vmem:[%s1 + $0x170] sm:$0xff]
    %v72 = vld [vmem:[%s1 + $0x178] sm:$0xff]
    %v73 = vld [vmem:[%s1 + $0x180] sm:$0xff]
    %v74 = vld [vmem:[%s1 + $0x188] sm:$0xff]
    %v75 = vld [vmem:[%s1 + $0x190] sm:$0xff]
    %v76 = vld [vmem:[%s1 + $0x198] sm:$0xff]
    %v77 = vld [vmem:[%s1 + $0x1a0] sm:$0xff]
    %v78 = vld [vmem:[%s1 + $0x1a8] sm:$0xff]
    %v79 = vld [vmem:[%s1 + $0x1b0] sm:$0xff]
    %v80 = vld [vmem:[%s1 + $0x1b8] sm:$0xff]
    %v81 = vld [vmem:[%s1 + $0x1c0] sm:$0xff]
    %v82 = vld [vmem:[%s1 + $0x1c8] sm:$0xff]
    %v83 = vld [vmem:[%s1 + $0x1d0] sm:$0xff]
    %v84 = vld [vmem:[%s1 + $0x1d8] sm:$0xff]
    %v85 = vld [vmem:[%s1 + $0x1e0] sm:$0xff]
    %v86 = vld [vmem:[%s1 + $0x1e8] sm:$0xff]
    %v87 = vld [vmem:[%s1 + $0x1f0] sm:$0xff]
    %v88 = vld [vmem:[%s1 + $0x1f8] sm:$0xff]
    %v89 = vld [vmem:[%s1 + $0x200] sm:$0xff]
    %v90 = vld [vmem:[%s1 + $0x208] sm:$0xff]
    %v91 = vld [vmem:[%s1 + $0x210] sm:$0xff]
    %v92 = vld [vmem:[%s1 + $0x218] sm:$0xff]
    %v93 = vld [vmem:[%s1 + $0x220] sm:$0xff]
    %v94 = vld [vmem:[%s1 + $0x228] sm:$0xff]
    %v95 = vld [vmem:[%s1 + $0x230] sm:$0xff]
    %v96 = vld [vmem:[%s1 + $0x238] sm:$0xff]
    %v97 = vld [vmem:[%s1 + $0x240] sm:$0xff]
    %v98 = vld [vmem:[%s1 + $0x248] sm:$0xff]
    %v99 = vld [vmem:[%s1 + $0x250] sm:$0xff]
    %v100 = vld [vmem:[%s1 + $0x258] sm:$0xff]
    %v101 = vld [vmem:[%s1 + $0x260] sm:$0xff]
    %v102 = vld [vmem:[%s1 + $0x268] sm:$0xff]
    %v103 = vld [vmem:[%s1 + $0x270] sm:$0xff]
    %v104 = vld [vmem:[%s1 + $0x278] sm:$0xff]
    %v105 = vld [vmem:[%s1 + $0x280] sm:$0xff]
    %v106 = vld [vmem:[%s1 + $0x288] sm:$0xff]
    %v107 = vld [vmem:[%s1 + $0x290] sm:$0xff]
    %v108 = vld [vmem:[%s1 + $0x298] sm:$0xff]
    %v109 = vld [vmem:[%s1 + $0x2a0] sm:$0xff]
    %v110 = vld [vmem:[%s1 + $0x2a8] sm:$0xff]
    %v111 = vld [vmem:[%s1 + $0x2b0] sm:$0xff]
    %v112 = vld [vmem:[%s1 + $0x2b8] sm:$0xff]
    %v113 = vld [vmem:[%s1 + $0x2c0] sm:$0xff]
    %v114 = vld [vmem:[%s1 + $0x2c8] sm:$0xff]
    %v115 = vld [vmem:[%s1 + $0x2d0] sm:$0xff]
    %v116 = vld [vmem:[%s1 + $0x2d8] sm:$0xff]
    %v117 = vld [vmem:[%s1 + $0x2e0] sm:$0xff]
    %v118 = vld [vmem:[%s1 + $0x2e8] sm:$0xff]
    %v119 = vld [vmem:[%s1 + $0x2f0] sm:$0xff]
    %v120 = vld [vmem:[%s1 + $0x2f8] sm:$0xff]
    %v121 = vld [vmem:[%s1 + $0x300] sm:$0xff]
    %v122 = vld [vmem:[%s1 + $0x308] sm:$0xff]
    %vm123 = vcmask 130048
    %v125 = vsel %vm123, %v24, 0
    %127 = vmatprep.subr.mxu0 0.0
    %128 = vmatpush1.msra.mxu0 %v25
    %129 = vmatprep.subr.mxu0 0.0
    %130 = vmatpush1.msra.mxu0 %v26
    %131 = vmatprep.subr.mxu0 0.0
    %132 = vmatpush1.msra.mxu0 %v27
    %133 = vmatprep.subr.mxu0 0.0
    %134 = vmatpush1.msra.mxu0 %v28
    %135 = vmatprep.subr.mxu0 0.0
    %136 = vmatpush1.msra.mxu0 %v29
    %137 = vmatprep.subr.mxu0 0.0
    %138 = vmatpush1.msra.mxu0 %v30
    %139 = vmatprep.subr.mxu0 0.0
    %140 = vmatpush1.msra.mxu0 %v31
    %141 = vmatprep.subr.mxu0 0.0
    %142 = vmatpush1.msra.mxu0 %v32
    %143 = vmatprep.subr.mxu0 0.0
    %144 = vmatpush1.msra.mxu0 %v33
    %145 = vmatprep.subr.mxu0 0.0
    %146 = vmatpush1.msra.mxu0 %v34
    %147 = vmatprep.subr.mxu0 0.0
    %148 = vmatpush1.msra.mxu0 %v35
    %149 = vmatprep.subr.mxu0 0.0
    %150 = vmatpush1.msra.mxu0 %v36
    %151 = vmatprep.subr.mxu0 0.0
    %152 = vmatpush1.msra.mxu0 %v37
    %153 = vmatprep.subr.mxu0 0.0
    %154 = vmatpush1.msra.mxu0 %v38
    %155 = vmatprep.subr.mxu0 0.0
    %156 = vmatpush1.msra.mxu0 %v39
    %157 = vmatprep.subr.mxu0 0.0
    %158 = vmatpush1.msra.mxu0 %v40
    %159 = vmatprep.subr.mxu0 0.0
    %160 = vmatpush1.msra.mxu0 %v41
    %161 = vmatprep.subr.mxu0 0.0
    %162 = vmatpush1.msra.mxu0 %v42
    %163 = vmatprep.subr.mxu0 0.0
    %164 = vmatpush1.msra.mxu0 %v43
    %165 = vmatprep.subr.mxu0 0.0
    %166 = vmatpush1.msra.mxu0 %v44
    %167 = vmatprep.subr.mxu0 0.0
    %168 = vmatpush1.msra.mxu0 %v45
    %169 = vmatprep.subr.mxu0 0.0
    %170 = vmatpush1.msra.mxu0 %v46
    %171 = vmatprep.subr.mxu0 0.0
    %172 = vmatpush1.msra.mxu0 %v47
    %173 = vmatprep.subr.mxu0 0.0
    %174 = vmatpush1.msra.mxu0 %v48
    %175 = vmatprep.subr.mxu0 0.0
    %176 = vmatpush1.msra.mxu0 %v49
    %177 = vmatprep.subr.mxu0 0.0
    %178 = vmatpush1.msra.mxu0 %v50
    %179 = vmatprep.subr.mxu0 0.0
    %180 = vmatpush1.msra.mxu0 %v51
    %181 = vmatprep.subr.mxu0 0.0
    %182 = vmatpush1.msra.mxu0 %v52
    %183 = vmatprep.subr.mxu0 0.0
    %184 = vmatpush1.msra.mxu0 %v53
    %185 = vmatprep.subr.mxu0 0.0
    %186 = vmatpush1.msra.mxu0 %v54
    %187 = vmatprep.subr.mxu0 0.0
    %188 = vmatpush1.msra.mxu0 %v55
    %189 = vmatprep.subr.mxu0 0.0
    %190 = vmatpush1.msra.mxu0 %v56
    %191 = vmatprep.mubr.f32.mxu0 %v19
    %192 = vmatmul.mubr.f32.gmra.mrb[0].mxu0 %v18
    %v193 = vpop.f32.mrb[0].mxu0
    %v194 = vadd.f32 0.0, %v193
    %v195 = vpop.f32.mrb[0].mxu0
    %196 = vdwg.mxu0
    %197 = vmatprep.subr.mxu0 0.0
    %198 = vmatpush1.msra.mxu0 %v57
    %199 = vmatprep.subr.mxu0 0.0
    %200 = vmatpush1.msra.mxu0 %v58
    %201 = vmatprep.subr.mxu0 0.0
    %202 = vmatpush1.msra.mxu0 %v59
    %203 = vmatprep.subr.mxu0 0.0
    %204 = vmatpush1.msra.mxu0 %v60
    %205 = vmatprep.subr.mxu0 0.0
    %206 = vmatpush1.msra.mxu0 %v61
    %207 = vmatprep.subr.mxu0 0.0
    %208 = vmatpush1.msra.mxu0 %v62
    %209 = vmatprep.subr.mxu0 0.0
    %210 = vmatpush1.msra.mxu0 %v63
    %211 = vmatprep.subr.mxu0 0.0
    %212 = vmatpush1.msra.mxu0 %v64
    %213 = vmatprep.subr.mxu0 0.0
    %214 = vmatpush1.msra.mxu0 %v65
    %215 = vmatprep.subr.mxu0 0.0
    %216 = vmatpush1.msra.mxu0 %v66
    %217 = vmatprep.subr.mxu0 0.0
    %218 = vmatpush1.msra.mxu0 %v67
    %219 = vmatprep.subr.mxu0 0.0
    %220 = vmatpush1.msra.mxu0 %v68
    %221 = vmatprep.subr.mxu0 0.0
    %222 = vmatpush1.msra.mxu0 %v69
    %223 = vmatprep.subr.mxu0 0.0
    %224 = vmatpush1.msra.mxu0 %v70
    %225 = vmatprep.subr.mxu0 0.0
    %226 = vmatpush1.msra.mxu0 %v71
    %227 = vmatprep.subr.mxu0 0.0
    %228 = vmatpush1.msra.mxu0 %v72
    %229 = vmatprep.subr.mxu0 0.0
    %230 = vmatpush1.msra.mxu0 %v73
    %231 = vmatprep.subr.mxu0 0.0
    %232 = vmatpush1.msra.mxu0 %v74
    %233 = vmatprep.subr.mxu0 0.0
    %234 = vmatpush1.msra.mxu0 %v75
    %235 = vmatprep.subr.mxu0 0.0
    %236 = vmatpush1.msra.mxu0 %v76
    %237 = vmatprep.subr.mxu0 0.0
    %238 = vmatpush1.msra.mxu0 %v77
    %239 = vmatprep.subr.mxu0 0.0
    %240 = vmatpush1.msra.mxu0 %v78
    %241 = vmatprep.subr.mxu0 0.0
    %242 = vmatpush1.msra.mxu0 %v79
    %243 = vmatprep.subr.mxu0 0.0
    %244 = vmatpush1.msra.mxu0 %v80
    %245 = vmatprep.subr.mxu0 0.0
    %246 = vmatpush1.msra.mxu0 %v81
    %247 = vmatprep.subr.mxu0 0.0
    %248 = vmatpush1.msra.mxu0 %v82
    %249 = vmatprep.subr.mxu0 0.0
    %250 = vmatpush1.msra.mxu0 %v83
    %251 = vmatprep.subr.mxu0 0.0
    %252 = vmatpush1.msra.mxu0 %v84
    %253 = vmatprep.subr.mxu0 0.0
    %254 = vmatpush1.msra.mxu0 %v85
    %255 = vmatprep.subr.mxu0 0.0
    %256 = vmatpush1.msra.mxu0 %v86
    %257 = vmatprep.subr.mxu0 0.0
    %258 = vmatpush1.msra.mxu0 %v87
    %259 = vmatprep.subr.mxu0 0.0
    %260 = vmatpush1.msra.mxu0 %v88
    %261 = vmatprep.mubr.f32.mxu0 %v21
    %262 = vmatmul.mubr.f32.gmra.mrb[0].mxu0 %v20
    %v263 = vpop.f32.mrb[0].mxu0
    %v264 = vadd.f32 %v194, %v263
    %v265 = vpop.f32.mrb[0].mxu0
    %266 = vdwg.mxu0
    %267 = vmatprep.subr.mxu0 0.0
    %268 = vmatpush1.msra.mxu0 %v89
    %269 = vmatprep.subr.mxu0 0.0
    %270 = vmatpush1.msra.mxu0 %v90
    %271 = vmatprep.subr.mxu0 0.0
    %272 = vmatpush1.msra.mxu0 %v91
    %273 = vmatprep.subr.mxu0 0.0
    %274 = vmatpush1.msra.mxu0 %v92
    %275 = vmatprep.subr.mxu0 0.0
    %276 = vmatpush1.msra.mxu0 %v93
    %277 = vmatprep.subr.mxu0 0.0
    %278 = vmatpush1.msra.mxu0 %v94
    %279 = vmatprep.subr.mxu0 0.0
    %280 = vmatpush1.msra.mxu0 %v95
    %281 = vmatprep.subr.mxu0 0.0
    %282 = vmatpush1.msra.mxu0 %v96
    %283 = vmatprep.subr.mxu0 0.0
    %284 = vmatpush1.msra.mxu0 %v97
    %285 = vmatprep.subr.mxu0 0.0
    %286 = vmatpush1.msra.mxu0 %v98
    %287 = vmatprep.subr.mxu0 0.0
    %288 = vmatpush1.msra.mxu0 %v99
    %289 = vmatprep.subr.mxu0 0.0
    %290 = vmatpush1.msra.mxu0 %v100
    %291 = vmatprep.subr.mxu0 0.0
    %292 = vmatpush1.msra.mxu0 %v101
    %293 = vmatprep.subr.mxu0 0.0
    %294 = vmatpush1.msra.mxu0 %v102
    %295 = vmatprep.subr.mxu0 0.0
    %296 = vmatpush1.msra.mxu0 %v103
    %297 = vmatprep.subr.mxu0 0.0
    %298 = vmatpush1.msra.mxu0 %v104
    %299 = vmatprep.subr.mxu0 0.0
    %300 = vmatpush1.msra.mxu0 %v105
    %301 = vmatprep.subr.mxu0 0.0
    %302 = vmatpush1.msra.mxu0 %v106
    %303 = vmatprep.subr.mxu0 0.0
    %304 = vmatpush1.msra.mxu0 %v107
    %305 = vmatprep.subr.mxu0 0.0
    %306 = vmatpush1.msra.mxu0 %v108
    %307 = vmatprep.subr.mxu0 0.0
    %308 = vmatpush1.msra.mxu0 %v109
    %309 = vmatprep.subr.mxu0 0.0
    %310 = vmatpush1.msra.mxu0 %v110
    %311 = vmatprep.subr.mxu0 0.0
    %312 = vmatpush1.msra.mxu0 %v111
    %313 = vmatprep.subr.mxu0 0.0
    %314 = vmatpush1.msra.mxu0 %v112
    %315 = vmatprep.subr.mxu0 0.0
    %316 = vmatpush1.msra.mxu0 %v113
    %317 = vmatprep.subr.mxu0 0.0
    %318 = vmatpush1.msra.mxu0 %v114
    %319 = vmatprep.subr.mxu0 0.0
    %320 = vmatpush1.msra.mxu0 %v115
    %321 = vmatprep.subr.mxu0 0.0
    %322 = vmatpush1.msra.mxu0 %v116
    %323 = vmatprep.subr.mxu0 0.0
    %324 = vmatpush1.msra.mxu0 %v117
    %325 = vmatprep.subr.mxu0 0.0
    %326 = vmatpush1.msra.mxu0 %v118
    %327 = vmatprep.subr.mxu0 0.0
    %328 = vmatpush1.msra.mxu0 %v119
    %329 = vmatprep.subr.mxu0 0.0
    %330 = vmatpush1.msra.mxu0 %v120
    %331 = vmatprep.mubr.f32.mxu0 %v23
    %332 = vmatmul.mubr.f32.gmra.mrb[0].mxu0 %v22
    %v333 = vpop.f32.mrb[0].mxu0
    %v334 = vadd.f32 %v264, %v333
    %v335 = vpop.f32.mrb[0].mxu0
    %336 = vdwg.mxu0
    %337 = vmatprep.subr.mxu0 0.0
    %338 = vmatpush1.msra.mxu0 %v121
    %339 = vmatprep.subr.mxu0 0.0
    %340 = vmatpush1.msra.mxu0 %v122
    %341 = vmatprep.subr.mxu0 0.0
    %342 = vmatpush1.msra.mxu0 0.0
    %343 = vmatprep.subr.mxu0 0.0
    %344 = vmatpush1.msra.mxu0 0.0
    %345 = vmatprep.subr.mxu0 0.0
    %346 = vmatpush1.msra.mxu0 0.0
    %347 = vmatprep.subr.mxu0 0.0
    %348 = vmatpush1.msra.mxu0 0.0
    %349 = vmatprep.subr.mxu0 0.0
    %350 = vmatpush1.msra.mxu0 0.0
    %351 = vmatprep.subr.mxu0 0.0
    %352 = vmatpush1.msra.mxu0 0.0
    %353 = vmatprep.subr.mxu0 0.0
    %354 = vmatpush1.msra.mxu0 0.0
    %355 = vmatprep.subr.mxu0 0.0
    %356 = vmatpush1.msra.mxu0 0.0
    %357 = vmatprep.subr.mxu0 0.0
    %358 = vmatpush1.msra.mxu0 0.0
    %359 = vmatprep.subr.mxu0 0.0
    %360 = vmatpush1.msra.mxu0 0.0
    %361 = vmatprep.subr.mxu0 0.0
    %362 = vmatpush1.msra.mxu0 0.0
    %363 = vmatprep.subr.mxu0 0.0
    %364 = vmatpush1.msra.mxu0 0.0
    %365 = vmatprep.subr.mxu0 0.0
    %366 = vmatpush1.msra.mxu0 0.0
    %367 = vmatprep.subr.mxu0 0.0
    %368 = vmatpush1.msra.mxu0 0.0
    %369 = vmatprep.subr.mxu0 0.0
    %370 = vmatpush1.msra.mxu0 0.0
    %371 = vmatprep.subr.mxu0 0.0
    %372 = vmatpush1.msra.mxu0 0.0
    %373 = vmatprep.subr.mxu0 0.0
    %374 = vmatpush1.msra.mxu0 0.0
    %375 = vmatprep.subr.mxu0 0.0
    %376 = vmatpush1.msra.mxu0 0.0
    %377 = vmatprep.subr.mxu0 0.0
    %378 = vmatpush1.msra.mxu0 0.0
    %379 = vmatprep.subr.mxu0 0.0
    %380 = vmatpush1.msra.mxu0 0.0
    %381 = vmatprep.subr.mxu0 0.0
    %382 = vmatpush1.msra.mxu0 0.0
    %383 = vmatprep.subr.mxu0 0.0
    %384 = vmatpush1.msra.mxu0 0.0
    %385 = vmatprep.subr.mxu0 0.0
    %386 = vmatpush1.msra.mxu0 0.0
    %387 = vmatprep.subr.mxu0 0.0
    %388 = vmatpush1.msra.mxu0 0.0
    %389 = vmatprep.subr.mxu0 0.0
    %390 = vmatpush1.msra.mxu0 0.0
    %391 = vmatprep.subr.mxu0 0.0
    %392 = vmatpush1.msra.mxu0 0.0
    %393 = vmatprep.subr.mxu0 0.0
    %394 = vmatpush1.msra.mxu0 0.0
    %395 = vmatprep.subr.mxu0 0.0
    %396 = vmatpush1.msra.mxu0 0.0
    %397 = vmatprep.subr.mxu0 0.0
    %398 = vmatpush1.msra.mxu0 0.0
    %399 = vmatprep.subr.mxu0 0.0
    %400 = vmatpush1.msra.mxu0 0.0
    %401 = vmatprep.mubr.f32.mxu0 0.0
    %402 = vmatmul.mubr.f32.gmra.mrb[0].mxu0 %v125
    %v403 = vpop.f32.mrb[0].mxu0
    %v404 = vadd.f32 %v334, %v403
    %v405 = vpop.f32.mrb[0].mxu0
    %406 = vdwg.mxu0
    %v407 = vmax.f32 %v404, 0.0
    %v408 = vld [vmem:[%s2] sm:$0xff]
    %v409 = vld [vmem:[%s2 + $0x8] sm:$0xff]
    %v410 = vld [vmem:[%s2 + $0x10] sm:$0xff]
    %v411 = vld [vmem:[%s2 + $0x18] sm:$0xff]
    %vm412 = vcmask 261120
    %v414 = vsel %vm412, %v407, 0
    %416 = vmatprep.subr.mxu0 0.0
    %417 = vmatpush1.msra.mxu0 %v408
    %418 = vmatprep.subr.mxu0 0.0
    %419 = vmatpush1.msra.mxu0 %v409
    %420 = vmatprep.subr.mxu0 0.0
    %421 = vmatpush1.msra.mxu0 %v410
    %422 = vmatprep.subr.mxu0 0.0
    %423 = vmatpush1.msra.mxu0 %v411
    %424 = vmatprep.subr.mxu0 0.0
    %425 = vmatpush1.msra.mxu0 0.0
    %426 = vmatprep.subr.mxu0 0.0
    %427 = vmatpush1.msra.mxu0 0.0
    %428 = vmatprep.subr.mxu0 0.0
    %429 = vmatpush1.msra.mxu0 0.0
    %430 = vmatprep.subr.mxu0 0.0
    %431 = vmatpush1.msra.mxu0 0.0
    %432 = vmatprep.subr.mxu0 0.0
    %433 = vmatpush1.msra.mxu0 0.0
    %434 = vmatprep.subr.mxu0 0.0
    %435 = vmatpush1.msra.mxu0 0.0
    %436 = vmatprep.subr.mxu0 0.0
    %437 = vmatpush1.msra.mxu0 0.0
    %438 = vmatprep.subr.mxu0 0.0
    %439 = vmatpush1.msra.mxu0 0.0
    %440 = vmatprep.subr.mxu0 0.0
    %441 = vmatpush1.msra.mxu0 0.0
    %442 = vmatprep.subr.mxu0 0.0
    %443 = vmatpush1.msra.mxu0 0.0
    %444 = vmatprep.subr.mxu0 0.0
    %445 = vmatpush1.msra.mxu0 0.0
    %446 = vmatprep.subr.mxu0 0.0
    %447 = vmatpush1.msra.mxu0 0.0
    %448 = vmatprep.subr.mxu0 0.0
    %449 = vmatpush1.msra.mxu0 0.0
    %450 = vmatprep.subr.mxu0 0.0
    %451 = vmatpush1.msra.mxu0 0.0
    %452 = vmatprep.subr.mxu0 0.0
    %453 = vmatpush1.msra.mxu0 0.0
    %454 = vmatprep.subr.mxu0 0.0
    %455 = vmatpush1.msra.mxu0 0.0
    %456 = vmatprep.subr.mxu0 0.0
    %457 = vmatpush1.msra.mxu0 0.0
    %458 = vmatprep.subr.mxu0 0.0
    %459 = vmatpush1.msra.mxu0 0.0
    %460 = vmatprep.subr.mxu0 0.0
    %461 = vmatpush1.msra.mxu0 0.0
    %462 = vmatprep.subr.mxu0 0.0
    %463 = vmatpush1.msra.mxu0 0.0
    %464 = vmatprep.subr.mxu0 0.0
    %465 = vmatpush1.msra.mxu0 0.0
    %466 = vmatprep.subr.mxu0 0.0
    %467 = vmatpush1.msra.mxu0 0.0
    %468 = vmatprep.subr.mxu0 0.0
    %469 = vmatpush1.msra.mxu0 0.0
    %470 = vmatprep.subr.mxu0 0.0
    %471 = vmatpush1.msra.mxu0 0.0
    %472 = vmatprep.subr.mxu0 0.0
    %473 = vmatpush1.msra.mxu0 0.0
    %474 = vmatprep.subr.mxu0 0.0
    %475 = vmatpush1.msra.mxu0 0.0
    %476 = vmatprep.subr.mxu0 0.0
    %477 = vmatpush1.msra.mxu0 0.0
    %478 = vmatprep.subr.mxu0 0.0
    %479 = vmatpush1.msra.mxu0 0.0
    %480 = vmatprep.mubr.f32.mxu0 0.0
    %481 = vmatmul.mubr.f32.gmra.mrb[0].mxu0 %v414
    %v482 = vpop.f32.mrb[0].mxu0
    %v483 = vadd.f32 0.0, %v482
    %v484 = vpop.f32.mrb[0].mxu0
    %485 = vdwg.mxu0
    %v486 = vmax.f32 %v483, 0.0
    %v487 = vld [vmem:[%s3] sm:$0xff]
    %v488 = vld [vmem:[%s3 + $0x8] sm:$0xff]
    %v489 = vld [vmem:[%s3 + $0x10] sm:$0xff]
    %v490 = vld [vmem:[%s3 + $0x18] sm:$0xff]
    %v492 = vsel %vm412, %v486, 0
    %494 = vmatprep.subr.mxu0 0.0
    %495 = vmatpush1.msra.mxu0 %v487
    %496 = vmatprep.subr.mxu0 0.0
    %497 = vmatpush1.msra.mxu0 %v488
    %498 = vmatprep.subr.mxu0 0.0
    %499 = vmatpush1.msra.mxu0 %v489
    %500 = vmatprep.subr.mxu0 0.0
    %501 = vmatpush1.msra.mxu0 %v490
    %502 = vmatprep.subr.mxu0 0.0
    %503 = vmatpush1.msra.mxu0 0.0
    %504 = vmatprep.subr.mxu0 0.0
    %505 = vmatpush1.msra.mxu0 0.0
    %506 = vmatprep.subr.mxu0 0.0
    %507 = vmatpush1.msra.mxu0 0.0
    %508 = vmatprep.subr.mxu0 0.0
    %509 = vmatpush1.msra.mxu0 0.0
    %510 = vmatprep.subr.mxu0 0.0
    %511 = vmatpush1.msra.mxu0 0.0
    %512 = vmatprep.subr.mxu0 0.0
    %513 = vmatpush1.msra.mxu0 0.0
    %514 = vmatprep.subr.mxu0 0.0
    %515 = vmatpush1.msra.mxu0 0.0
    %516 = vmatprep.subr.mxu0 0.0
    %517 = vmatpush1.msra.mxu0 0.0
    %518 = vmatprep.subr.mxu0 0.0
    %519 = vmatpush1.msra.mxu0 0.0
    %520 = vmatprep.subr.mxu0 0.0
    %521 = vmatpush1.msra.mxu0 0.0
    %522 = vmatprep.subr.mxu0 0.0
    %523 = vmatpush1.msra.mxu0 0.0
    %524 = vmatprep.subr.mxu0 0.0
    %525 = vmatpush1.msra.mxu0 0.0
    %526 = vmatprep.subr.mxu0 0.0
    %527 = vmatpush1.msra.mxu0 0.0
    %528 = vmatprep.subr.mxu0 0.0
    %529 = vmatpush1.msra.mxu0 0.0
    %530 = vmatprep.subr.mxu0 0.0
    %531 = vmatpush1.msra.mxu0 0.0
    %532 = vmatprep.subr.mxu0 0.0
    %533 = vmatpush1.msra.mxu0 0.0
    %534 = vmatprep.subr.mxu0 0.0
    %535 = vmatpush1.msra.mxu0 0.0
    %536 = vmatprep.subr.mxu0 0.0
    %537 = vmatpush1.msra.mxu0 0.0
    %538 = vmatprep.subr.mxu0 0.0
    %539 = vmatpush1.msra.mxu0 0.0
    %540 = vmatprep.subr.mxu0 0.0
    %541 = vmatpush1.msra.mxu0 0.0
    %542 = vmatprep.subr.mxu0 0.0
    %543 = vmatpush1.msra.mxu0 0.0
    %544 = vmatprep.subr.mxu0 0.0
    %545 = vmatpush1.msra.mxu0 0.0
    %546 = vmatprep.subr.mxu0 0.0
    %547 = vmatpush1.msra.mxu0 0.0
    %548 = vmatprep.subr.mxu0 0.0
    %549 = vmatpush1.msra.mxu0 0.0
    %550 = vmatprep.subr.mxu0 0.0
    %551 = vmatpush1.msra.mxu0 0.0
    %552 = vmatprep.subr.mxu0 0.0
    %553 = vmatpush1.msra.mxu0 0.0
    %554 = vmatprep.subr.mxu0 0.0
    %555 = vmatpush1.msra.mxu0 0.0
    %556 = vmatprep.subr.mxu0 0.0
    %557 = vmatpush1.msra.mxu0 0.0
    %558 = vmatprep.mubr.f32.mxu0 0.0
    %559 = vmatmul.mubr.f32.gmra.mrb[0].mxu0 %v492
    %v560 = vpop.f32.mrb[0].mxu0
    %v561 = vadd.f32 0.0, %v560
    %v562 = vpop.f32.mrb[0].mxu0
    %563 = vdwg.mxu0
    %564 = vst [vmem:[#allocation2] sm:$0xff] %v561
    // Predicated region
    $region18: #{tpu_custom_call.1} parent=1 // pred_check
      _
    $region19: #{tpu_custom_call.1} parent=1 // pred_check_branch
      %566 = sbr.rel (0) target = $region21
    $region20: #{tpu_custom_call.1} parent=1 // pred_region
      %s568 = ssub.s32 128, 128
      %569 = vsyncadd [#allocation3], %s568
      %s571 = sshll.u32 [#allocation2], 4
      %s572 = int_to_ptr.vmem [resolvable:$true] %s571
      %574 = dma.vmem_to_hbm [thread:$0]  %s572, 128, %s4, [#allocation3]
    $region21: #{tpu_custom_call.1} parent=1 // pred_fallthru
      _
    // Predicated region
    $region22: #{tpu_custom_call.1} parent=1 // pred_check
      _
    $region23: #{tpu_custom_call.1} parent=1 // pred_check_branch
      %576 = sbr.rel (0) target = $region25
    $region24: #{tpu_custom_call.1} parent=1 // pred_region
      %577 = dma.done [#allocation3], 128
    $region25: #{tpu_custom_call.1} parent=1 // pred_fallthru
      _
    %578 = vsyncpa [#allocation3], 1

</llo_original>
